<compile_context>
chip_gen: v5e
topology: v5e:2x2
jax: 0.10.0
libtpu: 0.0.40
codegen_flags: <defaults>
</compile_context>

<pallas_src>
import functools

import jax
import jax.numpy as jnp
from jax import lax
from jax.experimental import pallas as pl
from jax.experimental.pallas import tpu as pltpu


def _round_up(x, m):
    return ((x + m - 1) // m) * m


def _cdiv(a, b):
    return -(-a // b)


def _vmem_plan():
    """Returns (tile-sizing budget, scoped vmem limit) in bytes."""
    cap = 64 * 1024 * 1024                      # v7x-safe fallback
    try:
        cap = int(getattr(pltpu.get_tpu_info(), "vmem_capacity_bytes", cap))
    except Exception:
        pass
    budget = min((cap * 3) // 4, 96 * 1024 * 1024)
    limit = min((cap * 7) // 8, 112 * 1024 * 1024)
    return budget, limit


def _pick_spatial_tile(P, CKK_pad, C_out_pad, E, vmem_budget):
    """Largest 32-aligned spatial tile whose steady-state working set fits."""
    # Weight residency (assume default double-buffering on every input):
    weight_bytes = 2 * (C_out_pad * CKK_pad * 4            # W     (f32)
                        + E * C_out_pad * CKK_pad * 2      # dW    (bf16)
                        + C_out_pad * 4)                   # bias  (f32)
    weff_bytes = C_out_pad * CKK_pad * 2                   # scratch (single)
    per_row = 2 * (CKK_pad * 2) + 2 * (C_out_pad * 2)      # patches + out (2-buf)
    avail = max(vmem_budget - weight_bytes - weff_bytes, per_row * 32)
    tp_cap = max(32, min(int(avail // per_row), 2048))
    n_tiles = _cdiv(P, tp_cap)
    return _round_up(_cdiv(P, n_tiles), 32)


def _convmixlora_kernel(probs_smem, patches_ref, w_ref, dw_ref, bias_ref,
                        out_ref, weff_ref, *, num_experts):
    """grid = (B, num_p_tiles); one (TP, C_out_pad) output tile per step.

    probs_smem : (B, E)                 f32 SMEM (scalar-prefetched router weights)
    patches_ref: (1, TP, CKK_pad)       bf16 im2col tile of batch element b
    w_ref      : (C_out_pad, CKK_pad)   f32 frozen conv weight, flattened & padded
    dw_ref     : (E, C_out_pad, CKK_pad) bf16 per-expert scaled LoRA deltas
    bias_ref   : (1, C_out_pad)         f32 conv bias (zero in padded lanes)
    out_ref    : (1, TP, C_out_pad)     bf16
    weff_ref   : (C_out_pad, CKK_pad)   bf16 VMEM scratch (per-batch W_eff cache)
    """
    b = pl.program_id(0)
    pj = pl.program_id(1)

    # Build the per-batch effective weight once per batch element (pj == 0) and
    # cache it in VMEM; subsequent spatial tiles reuse it (pj axis "arbitrary").
    @pl.when(pj == 0)
    def _():
        weff = w_ref[...]                                  # f32
        for e in range(num_experts):                       # static unroll, E small
            weff = weff + probs_smem[b, e] * dw_ref[e]     # bf16 -> f32 promote
        weff_ref[...] = weff.astype(jnp.bfloat16)

    # Single MXU matmul: (TP, CKK_pad) x (CKK_pad, C_out_pad), f32 accumulation.
    acc = lax.dot_general(patches_ref[0], weff_ref[...], (((1,), (1,)), ((), ())),
                          preferred_element_type=jnp.float32)
    # NOTE: padded rows P..P_pad hold bias (not zeros); they are sliced off outside.
    out_ref[0] = (acc + bias_ref[...]).astype(out_ref.dtype)


def conv_mix_lora_forward(x, conv_w, conv_b, lora_A, lora_B, probs, *,
                          scaling, top_k):
    """ConvMixLoRA.forward for the (r > 0 and batch > 1) branch.

    x      : (B, C_in, H, W)  NCHW, like PyTorch
    conv_w : (C_out, C_in, k, k)    (groups=1, stride=1, padding=0 Conv2d defaults)
    conv_b : (C_out,)
    lora_A : (E, r*k, C_in*k)
    lora_B : (E, C_out*k, r*k)
    probs  : (B, E) router logits
    """
    B, C_in, H, W = x.shape
    C_out, _, k, _ = conv_w.shape
    E = lora_A.shape[0]
    Ho, Wo = H - k + 1, W - k + 1
    P = Ho * Wo
    CKK = C_in * k * k

    # Lane-friendly padded sizes (padding is exact zeros, sliced off below).
    CKK_pad = _round_up(CKK, 128)            # contraction / lane dim of patches
    C_out_pad = _round_up(C_out, 128)        # output lane dim -> unmasked stores

    vmem_budget, vmem_limit = _vmem_plan()
    TP = _pick_spatial_tile(P, CKK_pad, C_out_pad, E, vmem_budget)
    P_pad = _round_up(P, TP)

    # ---- glue: top-k mask + softmax over experts (B x E, tiny) ----
    # TODO(synk): torch.topk/scatter masked softmax is done in plain JAX, not in-kernel.
    _, idx = lax.top_k(probs, top_k)
    mask = jnp.zeros_like(probs).at[jnp.arange(B)[:, None], idx].set(1.0)
    probs_sm = jax.nn.softmax(jnp.where(mask > 0, probs, -jnp.inf), axis=-1)
    probs_sm = probs_sm.astype(jnp.float32)

    # ---- glue: parameter setup. (B_e @ A_e).view(conv.weight.shape) * scaling,
    #      flattened to the same (c, i, j) order as conv_w.reshape(C_out, -1),
    #      then zero-padded. Base W stays f32; LoRA deltas stored bf16. ----
    delta = jnp.matmul(lora_B, lora_A)                                  # (E, C_out*k, C_in*k) f32
    dw_flat = (delta.reshape(E, C_out, C_in, k, k) * scaling).reshape(E, C_out, CKK)
    w_flat = conv_w.reshape(C_out, CKK)
    w_pad = jnp.zeros((C_out_pad, CKK_pad), jnp.float32).at[:C_out, :CKK].set(w_flat)
    dw_pad = jnp.zeros((E, C_out_pad, CKK_pad), jnp.bfloat16)
    dw_pad = dw_pad.at[:, :C_out, :CKK].set(dw_flat.astype(jnp.bfloat16))
    bias_pad = jnp.zeros((1, C_out_pad), jnp.float32).at[0, :C_out].set(conv_b)

    # ---- glue: im2col (stride 1, VALID padding); ckk order = c*k*k + i*k + j.
    # x is cast to bf16 BEFORE slicing so the XLA im2col pass moves half the bytes.
    # TODO(synk): for large images, unfold inside the kernel from a DMA'd
    # (C_in, rows+k-1, W) row-strip instead of materializing k^2-inflated im2col.
    x_bf = x.astype(jnp.bfloat16)
    cols = []
    for i in range(k):
        for j in range(k):
            cols.append(x_bf[:, :, i:i + Ho, j:j + Wo])                 # (B, C_in, Ho, Wo)
    patches = jnp.stack(cols, axis=2)                                   # (B, C_in, k*k, Ho, Wo)
    patches = patches.reshape(B, CKK, P).transpose(0, 2, 1)             # (B, P, CKK)
    patches_pad = jnp.zeros((B, P_pad, CKK_pad), jnp.bfloat16)
    patches_pad = patches_pad.at[:, :P, :CKK].set(patches)

    kernel = functools.partial(_convmixlora_kernel, num_experts=E)

    flops = 2 * B * P_pad * CKK_pad * C_out_pad
    bytes_accessed = (B * P_pad * CKK_pad * 2          # patches read  (bf16)
                      + C_out_pad * CKK_pad * 4        # W             (f32)
                      + E * C_out_pad * CKK_pad * 2    # dW            (bf16)
                      + C_out_pad * 4                  # bias
                      + B * P_pad * C_out_pad * 2)     # output write  (bf16)

    # TODO(synk): consider pipeline_mode=pl.Buffered(1) on the grid-invariant
    # weight specs (w, dw, bias) to drop their second VMEM buffer on v7x.
    out = pl.pallas_call(
        kernel,
        out_shape=jax.ShapeDtypeStruct((B, P_pad, C_out_pad), jnp.bfloat16),
        grid_spec=pltpu.PrefetchScalarGridSpec(
            num_scalar_prefetch=1,                      # probs_sm -> SMEM
            grid=(B, P_pad // TP),
            in_specs=[
                pl.BlockSpec((1, TP, CKK_pad), lambda b, pj, pr: (b, pj, 0)),
                pl.BlockSpec((C_out_pad, CKK_pad), lambda b, pj, pr: (0, 0)),
                pl.BlockSpec((E, C_out_pad, CKK_pad), lambda b, pj, pr: (0, 0, 0)),
                pl.BlockSpec((1, C_out_pad), lambda b, pj, pr: (0, 0)),
            ],
            out_specs=pl.BlockSpec((1, TP, C_out_pad), lambda b, pj, pr: (b, pj, 0)),
            scratch_shapes=[pltpu.VMEM((C_out_pad, CKK_pad), jnp.bfloat16)],
        ),
        compiler_params=pltpu.CompilerParams(
            # batch axis "parallel" (megacore), spatial axis "arbitrary"
            # (W_eff scratch is carried across it).
            dimension_semantics=("parallel", "arbitrary"),
            vmem_limit_bytes=vmem_limit),
        cost_estimate=pl.CostEstimate(flops=flops, transcendentals=0,
                                      bytes_accessed=bytes_accessed),
    )(probs_sm, patches_pad, w_pad, dw_pad, bias_pad)

    # drop padding, cast back to f32, back to NCHW (matches PyTorch conv layout)
    out = out[:, :P, :C_out].astype(jnp.float32)
    return out.reshape(B, Ho, Wo, C_out).transpose(0, 3, 1, 2)


def reference(x, conv_w, conv_b, lora_A, lora_B, probs, scaling, top_k):
    """Pure-JAX f32 replica of the PyTorch forward (batch>1 branch) for checking."""
    B = x.shape[0]
    E = lora_A.shape[0]
    _, idx = lax.top_k(probs, top_k)
    mask = jnp.zeros_like(probs).at[jnp.arange(B)[:, None], idx].set(1.0)
    p = jax.nn.softmax(jnp.where(mask > 0, probs, -jnp.inf), axis=-1)
    dn = ('NCHW', 'OIHW', 'NCHW')
    out = lax.conv_general_dilated(x, conv_w, (1, 1), 'VALID', dimension_numbers=dn)
    out = out + conv_b[None, :, None, None]
    for e in range(E):
        dW = (lora_B[e] @ lora_A[e]).reshape(conv_w.shape) * scaling
        out = out + p[:, e][:, None, None, None] * lax.conv_general_dilated(
            x, dW, (1, 1), 'VALID', dimension_numbers=dn)
    return out


if __name__ == "__main__":
    # Small shapes consistent with the module: Conv2d(4, 8, 3), 4 experts, rank 2.
    B, C_in, H, W = 2, 4, 16, 16
    C_out, k = 8, 3
    r, E, top_k = 2, 4, 2
    lora_alpha = 4
    scaling = lora_alpha / r

    key = jax.random.PRNGKey(0)
    ks = jax.random.split(key, 6)
    x = jax.random.normal(ks[0], (B, C_in, H, W), jnp.float32)
    conv_w = jax.random.uniform(ks[1], (C_out, C_in, k, k), jnp.float32, -0.3, 0.3)
    conv_b = jax.random.uniform(ks[2], (C_out,), jnp.float32, -0.1, 0.1)
    # NOTE: the real module zero-inits lora_B (LoRA path starts at 0); we use
    # nonzero deterministic values so the expert path is actually exercised.
    lora_A = 0.1 * jax.random.normal(ks[3], (E, r * k, C_in * k), jnp.float32)
    lora_B = 0.1 * jax.random.normal(ks[4], (E, C_out * k, r * k), jnp.float32)
    probs = jax.random.normal(ks[5], (B, E), jnp.float32)

    out = conv_mix_lora_forward(x, conv_w, conv_b, lora_A, lora_B, probs,
                                scaling=scaling, top_k=top_k)
    out = jax.block_until_ready(out)

    ref = reference(x, conv_w, conv_b, lora_A, lora_B, probs, scaling, top_k)
    assert out.shape == ref.shape == (B, C_out, H - k + 1, W - k + 1), (out.shape, ref.shape)
    max_err = float(jnp.max(jnp.abs(out - ref)))
    # bf16 MXU operands and bf16 output store => rounding-only error vs f32 reference.
    assert jnp.allclose(out, ref, atol=5e-2, rtol=5e-2), max_err

    print("KERNEL_OK")
</pallas_src>

<mosaic_0001>
module attributes {stable_mosaic.version = 11 : i64} {
  func.func @_convmixlora_kernel(%arg0: i32, %arg1: i32, %arg2: memref<2x4xf32, #tpu.memory_space<smem>>, %arg3: memref<1x224x128xbf16, #tpu.memory_space<vmem>>, %arg4: memref<128x128xf32, #tpu.memory_space<vmem>>, %arg5: memref<4x128x128xbf16, #tpu.memory_space<vmem>>, %arg6: memref<1x128xf32, #tpu.memory_space<vmem>>, %arg7: memref<1x224x128xbf16, #tpu.memory_space<vmem>>, %arg8: memref<128x128xbf16, #tpu.memory_space<vmem>>) attributes {dimension_semantics = [#tpu.dimension_semantics<parallel>, #tpu.dimension_semantics<arbitrary>], iteration_bounds = array<i64: 2, 1>, scalar_prefetch = 1 : i64, scratch_operands = 1 : i64, tpu.core_type = #tpu.core_type<tc>, window_params = [{transform_indices = @transform_0, window_bounds = array<i64: 1, 224, 128>}, {pipeline_mode = #tpu.pipeline_mode<synchronous>, transform_indices = @transform_1, window_bounds = array<i64: 128, 128>}, {pipeline_mode = #tpu.pipeline_mode<synchronous>, transform_indices = @transform_2, window_bounds = array<i64: 4, 128, 128>}, {pipeline_mode = #tpu.pipeline_mode<synchronous>, transform_indices = @transform_3, window_bounds = array<i64: 1, 128>}, {transform_indices = @transform_4, window_bounds = array<i64: 1, 224, 128>}]} {
    %c0_i32 = arith.constant 0 : i32
    %0 = arith.cmpi eq, %arg1, %c0_i32 : i32
    %1 = arith.extui %0 : i1 to i32
    %c0_i32_0 = arith.constant 0 : i32
    %2 = arith.cmpi ne, %1, %c0_i32_0 : i32
    scf.if %2 {
      %c0_10 = arith.constant 0 : index
      %c0_11 = arith.constant 0 : index
      %14 = vector.load %arg4[%c0_10, %c0_11] : memref<128x128xf32, #tpu.memory_space<vmem>>, vector<128x128xf32>
      %15 = arith.index_cast %arg0 : i32 to index
      %c0_12 = arith.constant 0 : index
      %16 = memref.load %arg2[%15, %c0_12] : memref<2x4xf32, #tpu.memory_space<smem>>
      %c0_13 = arith.constant 0 : index
      %c0_14 = arith.constant 0 : index
      %c0_15 = arith.constant 0 : index
      %17 = vector.load %arg5[%c0_13, %c0_14, %c0_15] : memref<4x128x128xbf16, #tpu.memory_space<vmem>>, vector<1x128x128xbf16>
      %18 = vector.shape_cast %17 : vector<1x128x128xbf16> to vector<128x128xbf16>
      %19 = arith.extf %18 : vector<128x128xbf16> to vector<128x128xf32>
      %20 = vector.broadcast %16 : f32 to vector<128x128xf32>
      %21 = arith.mulf %20, %19 : vector<128x128xf32>
      %22 = arith.addf %14, %21 : vector<128x128xf32>
      %23 = arith.index_cast %arg0 : i32 to index
      %c1 = arith.constant 1 : index
      %24 = memref.load %arg2[%23, %c1] : memref<2x4xf32, #tpu.memory_space<smem>>
      %c1_16 = arith.constant 1 : index
      %c0_17 = arith.constant 0 : index
      %c0_18 = arith.constant 0 : index
      %25 = vector.load %arg5[%c1_16, %c0_17, %c0_18] : memref<4x128x128xbf16, #tpu.memory_space<vmem>>, vector<1x128x128xbf16>
      %26 = vector.shape_cast %25 : vector<1x128x128xbf16> to vector<128x128xbf16>
      %27 = arith.extf %26 : vector<128x128xbf16> to vector<128x128xf32>
      %28 = vector.broadcast %24 : f32 to vector<128x128xf32>
      %29 = arith.mulf %28, %27 : vector<128x128xf32>
      %30 = arith.addf %22, %29 : vector<128x128xf32>
      %31 = arith.index_cast %arg0 : i32 to index
      %c2 = arith.constant 2 : index
      %32 = memref.load %arg2[%31, %c2] : memref<2x4xf32, #tpu.memory_space<smem>>
      %c2_19 = arith.constant 2 : index
      %c0_20 = arith.constant 0 : index
      %c0_21 = arith.constant 0 : index
      %33 = vector.load %arg5[%c2_19, %c0_20, %c0_21] : memref<4x128x128xbf16, #tpu.memory_space<vmem>>, vector<1x128x128xbf16>
      %34 = vector.shape_cast %33 : vector<1x128x128xbf16> to vector<128x128xbf16>
      %35 = arith.extf %34 : vector<128x128xbf16> to vector<128x128xf32>
      %36 = vector.broadcast %32 : f32 to vector<128x128xf32>
      %37 = arith.mulf %36, %35 : vector<128x128xf32>
      %38 = arith.addf %30, %37 : vector<128x128xf32>
      %39 = arith.index_cast %arg0 : i32 to index
      %c3 = arith.constant 3 : index
      %40 = memref.load %arg2[%39, %c3] : memref<2x4xf32, #tpu.memory_space<smem>>
      %c3_22 = arith.constant 3 : index
      %c0_23 = arith.constant 0 : index
      %c0_24 = arith.constant 0 : index
      %41 = vector.load %arg5[%c3_22, %c0_23, %c0_24] : memref<4x128x128xbf16, #tpu.memory_space<vmem>>, vector<1x128x128xbf16>
      %42 = vector.shape_cast %41 : vector<1x128x128xbf16> to vector<128x128xbf16>
      %43 = arith.extf %42 : vector<128x128xbf16> to vector<128x128xf32>
      %44 = vector.broadcast %40 : f32 to vector<128x128xf32>
      %45 = arith.mulf %44, %43 : vector<128x128xf32>
      %46 = arith.addf %38, %45 : vector<128x128xf32>
      %47 = arith.truncf %46 : vector<128x128xf32> to vector<128x128xbf16>
      %c0_25 = arith.constant 0 : index
      %c0_26 = arith.constant 0 : index
      %48 = vector.load %arg8[%c0_25, %c0_26] : memref<128x128xbf16, #tpu.memory_space<vmem>>, vector<128x128xbf16>
      tpu.vector_store %arg8[%c0_25, %c0_26], %47 {strides = array<i32>} : memref<128x128xbf16, #tpu.memory_space<vmem>>, vector<128x128xbf16>,
    } else {
    }
    %c0 = arith.constant 0 : index
    %c0_1 = arith.constant 0 : index
    %c0_2 = arith.constant 0 : index
    %3 = vector.load %arg3[%c0, %c0_1, %c0_2] : memref<1x224x128xbf16, #tpu.memory_space<vmem>>, vector<1x224x128xbf16>
    %4 = vector.shape_cast %3 : vector<1x224x128xbf16> to vector<224x128xbf16>
    %c0_3 = arith.constant 0 : index
    %c0_4 = arith.constant 0 : index
    %5 = vector.load %arg8[%c0_3, %c0_4] : memref<128x128xbf16, #tpu.memory_space<vmem>>, vector<128x128xbf16>
    %cst = arith.constant dense<0.000000e+00> : vector<224x128xf32>
    %6 = tpu.matmul %4, %5, %cst {dimension_numbers = #tpu.dot_dimension_numbers<[1], [1], [0], [0], [0, 0, 1, 0], [], []>} : vector<224x128xbf16>, vector<128x128xbf16>, vector<224x128xf32> -> vector<224x128xf32>
    %c0_5 = arith.constant 0 : index
    %c0_6 = arith.constant 0 : index
    %7 = vector.load %arg6[%c0_5, %c0_6] : memref<1x128xf32, #tpu.memory_space<vmem>>, vector<1x128xf32>
    %8 = vector.broadcast %7 : vector<1x128xf32> to vector<224x128xf32>
    %9 = arith.addf %6, %8 : vector<224x128xf32>
    %10 = arith.truncf %9 : vector<224x128xf32> to vector<224x128xbf16>
    %c0_7 = arith.constant 0 : index
    %c0_8 = arith.constant 0 : index
    %c0_9 = arith.constant 0 : index
    %11 = vector.load %arg7[%c0_7, %c0_8, %c0_9] : memref<1x224x128xbf16, #tpu.memory_space<vmem>>, vector<1x224x128xbf16>
    %12 = vector.shape_cast %11 : vector<1x224x128xbf16> to vector<224x128xbf16>
    %13 = vector.shape_cast %10 : vector<224x128xbf16> to vector<1x224x128xbf16>
    tpu.vector_store %arg7[%c0_7, %c0_8, %c0_9], %13 {strides = array<i32>} : memref<1x224x128xbf16, #tpu.memory_space<vmem>>, vector<1x224x128xbf16>,
    return
  }
  func.func @transform_0(%arg0: i32, %arg1: i32, %arg2: memref<2x4xf32, #tpu.memory_space<smem>>) -> (i32, i32, i32) {
    %c0_i32 = arith.constant 0 : i32
    %c0_i32_0 = arith.constant 0 : i32
    return %arg0, %arg1, %c0_i32 : i32, i32, i32
  }
  func.func @transform_1(%arg0: i32, %arg1: i32, %arg2: memref<2x4xf32, #tpu.memory_space<smem>>) -> (i32, i32) {
    %c0_i32 = arith.constant 0 : i32
    %c0_i32_0 = arith.constant 0 : i32
    %c0_i32_1 = arith.constant 0 : i32
    return %c0_i32, %c0_i32_0 : i32, i32
  }
  func.func @transform_2(%arg0: i32, %arg1: i32, %arg2: memref<2x4xf32, #tpu.memory_space<smem>>) -> (i32, i32, i32) {
    %c0_i32 = arith.constant 0 : i32
    %c0_i32_0 = arith.constant 0 : i32
    %c0_i32_1 = arith.constant 0 : i32
    %c0_i32_2 = arith.constant 0 : i32
    return %c0_i32, %c0_i32_0, %c0_i32_1 : i32, i32, i32
  }
  func.func @transform_3(%arg0: i32, %arg1: i32, %arg2: memref<2x4xf32, #tpu.memory_space<smem>>) -> (i32, i32) {
    %c0_i32 = arith.constant 0 : i32
    %c0_i32_0 = arith.constant 0 : i32
    %c0_i32_1 = arith.constant 0 : i32
    return %c0_i32, %c0_i32_0 : i32, i32
  }
  func.func @transform_4(%arg0: i32, %arg1: i32, %arg2: memref<2x4xf32, #tpu.memory_space<smem>>) -> (i32, i32, i32) {
    %c0_i32 = arith.constant 0 : i32
    %c0_i32_0 = arith.constant 0 : i32
    return %arg0, %arg1, %c0_i32 : i32, i32, i32
  }
}

</mosaic_0001>

<llo_original>
// kernel: tpu_custom_call.1
$region0: #{tpu_custom_call.1}
  #allocation0 [shape = 'u32[]', space=smem, size = 0x4, offset = 0x4, fixed_abs, tag = 'smem constant byte address 0x4 - core index']
  #allocation1 [shape = 'u32[72,128]{1,0:T(1,128)}', space=vmem, size = 0x9000, scoped, tag = 'internal scratch']
  #allocation2 [shape = 'bf16[128,128]{1,0:T(8,128)(2,1)}', space=vmem, size = 0x8000, scoped, tag = 'scratch operand']
  #allocation3 [shape = 's32[1]{0}', space=sflag, size = 0x4, scoped, tag = 'scoped memory for tpu_custom_call.1']
  #allocation4 [shape = 'u8[1024]{0}', space=smem, size = 0x400, scoped, tag = 'prefetched SMEM operand 0']
  %s0 = inlined_call_operand.hbm [shape: f32[2,4], index: 0, kind: input, shape index: {}]
  %s1 = inlined_call_operand.hbm [shape: bf16[2,224,128], index: 1, kind: input, shape index: {}]
  %s2 = inlined_call_operand.hbm [shape: f32[128,128], index: 2, kind: input, shape index: {}]
  %s3 = inlined_call_operand.hbm [shape: bf16[4,128,128], index: 3, kind: input, shape index: {}]
  %s4 = inlined_call_operand.vmem [shape: f32[1,128], index: 4, kind: input, shape index: {}]
  %s5 = inlined_call_operand.hbm [shape: bf16[2,224,128], index: 5, kind: output, shape index: {}]
  %s6 = sld [smem:[#allocation0]]
  $region65: #{tpu_custom_call.1} parent=0
    _
  %s8 = ssub.s32 1, %s6
  %s9 = scalar_select 0, %s8, %s6
  %s11 = sshll.u32 %s0, 4
  %s12 = int_to_ptr.hbm [resolvable:$true] %s11
  %14 = dma.hbm_to_smem %s12, 32, [#allocation4], [#allocation3]
  %16 = dma.done [#allocation3], 32
  %17 = sfence
  $region1: #{tpu_custom_call.1} parent=0
    #allocation5 [shape = 'u8[114688]{0}', space=vmem, size = 0x1c000, scoped, tag = 'input window, operand 1']
    #allocation6 [shape = 's32[2]{0}', space=sflag, size = 0x8, scoped, tag = 'scoped memory for tpu_custom_call.1']
    #allocation7 [shape = 's32[2]{0}', space=sflag, size = 0x8, scoped, tag = 'scoped memory for tpu_custom_call.1']
    #allocation8 [shape = 'u8[65536]{0}', space=vmem, size = 0x10000, scoped, tag = 'input window, operand 2, single buffered']
    #allocation9 [shape = 's32[1]{0}', space=sflag, size = 0x4, scoped, tag = 'scoped memory for tpu_custom_call.1']
    #allocation10 [shape = 'u8[131072]{0}', space=vmem, size = 0x20000, scoped, tag = 'input window, operand 3, single buffered']
    #allocation11 [shape = 'u8[114688]{0}', space=vmem, size = 0x1c000, scoped, tag = 'output window, operand 0']
    %18 = vsyncpa [#allocation6], 0
    %s19 = scalar_lea.sflag [#allocation6], 1
    %20 = vsyncpa %s19, 0
    %21 = vsyncpa [#allocation9], 0
    %22 = vsyncpa [#allocation7], 0
    %s23 = scalar_lea.sflag [#allocation7], 1
    %24 = vsyncpa %s23, 0
    loop: start=0, step=1, limit=4
    $region2: #{tpu_custom_call.1} parent=1 // loop_pre_header
      _
    $region3: #{tpu_custom_call.1} parent=1 // loop_header
      %s26 = sphi 0, %s30
      %p27 = scmp.ge.s32.totalorder %s26, 4
      %s33 = sphi 0, %s45
      %s34 = sphi 0, %s41
      %s35 = sphi 0, %s33
      %s36 = sphi 0, %s34
      %s37 = sphi 0, %s35
      %s38 = sphi 0, %s36
      %s50 = sphi 0, %s52
      %s53 = sphi 0, %s50
      %s54 = sphi 0, %s53
      %s70 = sphi 0, %s54
      %s74 = sphi 0, %s74
      %s76 = sphi 0, %s74
      %s77 = sphi 0, %s76
      %s91 = sphi 0, %s77
      %s95 = sphi 0, %s95
      %s97 = sphi 0, %s95
      %s98 = sphi 0, %s97
      %s112 = sphi 0, %s98
      %s116 = sphi 0, %s116
      %s118 = sphi 0, %s116
      %s119 = sphi 0, %s118
      %s133 = sphi 0, %s119
      %s141 = sphi 0, %s143
      %s144 = sphi 0, %s141
      %s145 = sphi 0, %s144
      %s161 = sphi 0, %s145
    $region4: #{tpu_custom_call.1} parent=1 // loop_header_branch
      %29 = sbr.rel (%p27) target = $region8
    $region5: #{tpu_custom_call.1} parent=1 // loop_body
      %s31 = ssub.s32 %s26, 1
      %s32 = ssub.s32 %s26, 2
      %s39 = sadd.s32 1, %s34
      %p40 = scmp.ge.s32.totalorder %s39, 1
      %s41 = scalar_select %p40, 0, %s39
      %s42 = sadd.s32 1, %s33
      %s43 = scalar_select %p40, %s42, %s33
      %p44 = scmp.ge.s32.totalorder %s43, 2
      %s45 = scalar_select %p44, 0, %s43
      %s46 = ssub.s32 %s33, %s45
      %s47 = ssub.s32 %s34, %s41
      %s48 = sor.u32 %s46, %s47
      %p49 = scmp.eq.s32.totalorder %s48, 0
      %s51 = sadd.s32 %s50, 1
      %s52 = scalar_select %p49, %s50, %s51
      %p55 = pneg %p49
      %p56 = scmp.eq.s32.totalorder %s26, 1
      %p57 = por %p55, %p56
      %p58 = scmp.ne.s32.totalorder %s50, %s53
      %p59 = scmp.eq.s32.totalorder %s26, 0
      %p60 = por %p58, %p59
      %p61 = scmp.ne.s32.totalorder %s50, %s53
      %p62 = scmp.eq.s32.totalorder %s31, 1
      %p63 = por %p61, %p62
      %p64 = scmp.ne.s32.totalorder %s53, %s54
      %p65 = scmp.eq.s32.totalorder %s31, 0
      %p66 = por %p64, %p65
      %p67 = scmp.ne.s32.totalorder %s53, %s54
      %p68 = scmp.eq.s32.totalorder %s32, 1
      %p69 = por %p67, %p68
      %p71 = scmp.ne.s32.totalorder %s54, %s70
      %p72 = scmp.eq.s32.totalorder %s32, 0
      %p73 = por %p71, %p72
      %s75 = sadd.s32 %s74, 1
      %p78 = scmp.eq.s32.totalorder %s26, 1
      %p79 = scmp.ne.s32.totalorder %s74, %s76
      %p80 = scmp.eq.s32.totalorder %s26, 0
      %p81 = por %p79, %p80
      %p82 = scmp.ne.s32.totalorder %s74, %s76
      %p83 = scmp.eq.s32.totalorder %s31, 1
      %p84 = por %p82, %p83
      %p85 = scmp.ne.s32.totalorder %s76, %s77
      %p86 = scmp.eq.s32.totalorder %s31, 0
      %p87 = por %p85, %p86
      %p88 = scmp.ne.s32.totalorder %s76, %s77
      %p89 = scmp.eq.s32.totalorder %s32, 1
      %p90 = por %p88, %p89
      %p92 = scmp.ne.s32.totalorder %s77, %s91
      %p93 = scmp.eq.s32.totalorder %s32, 0
      %p94 = por %p92, %p93
      %s96 = sadd.s32 %s95, 1
      %p99 = scmp.eq.s32.totalorder %s26, 1
      %p100 = scmp.ne.s32.totalorder %s95, %s97
      %p101 = scmp.eq.s32.totalorder %s26, 0
      %p102 = por %p100, %p101
      %p103 = scmp.ne.s32.totalorder %s95, %s97
      %p104 = scmp.eq.s32.totalorder %s31, 1
      %p105 = por %p103, %p104
      %p106 = scmp.ne.s32.totalorder %s97, %s98
      %p107 = scmp.eq.s32.totalorder %s31, 0
      %p108 = por %p106, %p107
      %p109 = scmp.ne.s32.totalorder %s97, %s98
      %p110 = scmp.eq.s32.totalorder %s32, 1
      %p111 = por %p109, %p110
      %p113 = scmp.ne.s32.totalorder %s98, %s112
      %p114 = scmp.eq.s32.totalorder %s32, 0
      %p115 = por %p113, %p114
      %s117 = sadd.s32 %s116, 1
      %p120 = scmp.eq.s32.totalorder %s26, 1
      %p121 = scmp.ne.s32.totalorder %s116, %s118
      %p122 = scmp.eq.s32.totalorder %s26, 0
      %p123 = por %p121, %p122
      %p124 = scmp.ne.s32.totalorder %s116, %s118
      %p125 = scmp.eq.s32.totalorder %s31, 1
      %p126 = por %p124, %p125
      %p127 = scmp.ne.s32.totalorder %s118, %s119
      %p128 = scmp.eq.s32.totalorder %s31, 0
      %p129 = por %p127, %p128
      %p130 = scmp.ne.s32.totalorder %s118, %s119
      %p131 = scmp.eq.s32.totalorder %s32, 1
      %p132 = por %p130, %p131
      %p134 = scmp.ne.s32.totalorder %s119, %s133
      %p135 = scmp.eq.s32.totalorder %s32, 0
      %p136 = por %p134, %p135
      %s137 = ssub.s32 %s33, %s45
      %s138 = ssub.s32 %s34, %s41
      %s139 = sor.u32 %s137, %s138
      %p140 = scmp.eq.s32.totalorder %s139, 0
      %s142 = sadd.s32 %s141, 1
      %s143 = scalar_select %p140, %s141, %s142
      %p146 = pneg %p140
      %p147 = scmp.eq.s32.totalorder %s26, 1
      %p148 = por %p146, %p147
      %p149 = scmp.ne.s32.totalorder %s141, %s144
      %p150 = scmp.eq.s32.totalorder %s26, 0
      %p151 = por %p149, %p150
      %p152 = scmp.ne.s32.totalorder %s141, %s144
      %p153 = scmp.eq.s32.totalorder %s31, 1
      %p154 = por %p152, %p153
      %p155 = scmp.ne.s32.totalorder %s144, %s145
      %p156 = scmp.eq.s32.totalorder %s31, 0
      %p157 = por %p155, %p156
      %p158 = scmp.ne.s32.totalorder %s144, %s145
      %p159 = scmp.eq.s32.totalorder %s32, 1
      %p160 = por %p158, %p159
      %p162 = scmp.ne.s32.totalorder %s145, %s161
      %p163 = scmp.eq.s32.totalorder %s32, 0
      %p164 = por %p162, %p163
      %p165 = scmp.le.s32.totalorder 1, %s26
      %p166 = scmp.lt.s32.totalorder %s26, 3
      %p167 = pnand %p165, %p166
      %p168 = pneg %p167
      // Predicated region
      $region9: #{tpu_custom_call.1} parent=5 // pred_check
        _
      $region10: #{tpu_custom_call.1} parent=5 // pred_check_branch
        %170 = sbr.rel (%p167) target = $region12
      $region11: #{tpu_custom_call.1} parent=5 // pred_region
        %s171 = ssub.s32 %s26, 1
        // Predicated region
        $region13: #{tpu_custom_call.1} parent=11 // pred_check
          %p172 = pneg %p87
        $region14: #{tpu_custom_call.1} parent=11 // pred_check_branch
          %174 = sbr.rel (%p172) target = $region16
        $region15: #{tpu_custom_call.1} parent=11 // pred_region
          %176 = vsyncadd [#allocation9], 0
          %s177 = sshll.u32 %s2, 4
          %s178 = int_to_ptr.hbm [resolvable:$true] %s177
          %s179 = sshll.u32 [#allocation8], 4
          %s180 = int_to_ptr.vmem [resolvable:$true] %s179
          %185 = dma.hbm_to_vmem [thread:$0]  %s178, 2048, %s180, [#allocation9], 128, 128, 8
        $region16: #{tpu_custom_call.1} parent=11 // pred_fallthru
          _
        // Predicated region
        $region17: #{tpu_custom_call.1} parent=11 // pred_check
          %p186 = pneg %p108
        $region18: #{tpu_custom_call.1} parent=11 // pred_check_branch
          %188 = sbr.rel (%p186) target = $region20
        $region19: #{tpu_custom_call.1} parent=11 // pred_region
          %190 = vsyncadd [#allocation9], 0
          %s191 = sshll.u32 %s3, 4
          %s192 = int_to_ptr.hbm [resolvable:$true] %s191
          %s193 = sshll.u32 [#allocation10], 4
          %s194 = int_to_ptr.vmem [resolvable:$true] %s193
          %199 = dma.hbm_to_vmem [thread:$0]  %s192, 4096, %s194, [#allocation9], 64, 64, 4
        $region20: #{tpu_custom_call.1} parent=11 // pred_fallthru
          _
        // Predicated region
        $region21: #{tpu_custom_call.1} parent=11 // pred_check
          %p200 = pneg %p129
        $region22: #{tpu_custom_call.1} parent=11 // pred_check_branch
          %202 = sbr.rel (%p200) target = $region24
        $region23: #{tpu_custom_call.1} parent=11 // pred_region
          _
        $region24: #{tpu_custom_call.1} parent=11 // pred_fallthru
          _
      $region12: #{tpu_custom_call.1} parent=5 // pred_fallthru
        _
      %p203 = scmp.lt.s32.totalorder %s26, 2
      // Predicated region
      $region25: #{tpu_custom_call.1} parent=5 // pred_check
        %p204 = pneg %p203
      $region26: #{tpu_custom_call.1} parent=5 // pred_check_branch
        %206 = sbr.rel (%p204) target = $region28
      $region27: #{tpu_custom_call.1} parent=5 // pred_region
        // Predicated region
        $region29: #{tpu_custom_call.1} parent=27 // pred_check
          %p207 = pneg %p60
        $region30: #{tpu_custom_call.1} parent=27 // pred_check_branch
          %209 = sbr.rel (%p207) target = $region32
        $region31: #{tpu_custom_call.1} parent=27 // pred_region
          %s210 = sand.u32 %s50, 1
          %s211 = scalar_lea.sflag [#allocation6], %s210
          %s212 = sand.u32 %s50, 1
          %s213 = smul.addr %s212, 112
          %s214 = scalar_lea.vmem [#allocation5], %s213
          %s215 = smul.u32 28, %s34
          %217 = vsyncadd %s211, 0
          %s218 = smul.addr %s33, 28
          %s219 = sadd.s32 %s215, %s218
          %s220 = smul.addr %s219, 4
          %s221 = scalar_lea.hbm %s1, %s220
          %s222 = sshll.u32 %s221, 4
          %s223 = int_to_ptr.hbm [resolvable:$true] %s222
          %s224 = sshll.u32 %s214, 4
          %s225 = int_to_ptr.vmem [resolvable:$true] %s224
          %230 = dma.hbm_to_vmem [thread:$0]  %s223, 1792, %s225, %s211, 64, 64, 4
        $region32: #{tpu_custom_call.1} parent=27 // pred_fallthru
          _
      $region28: #{tpu_custom_call.1} parent=5 // pred_fallthru
        _
      %p231 = scmp.le.s32.totalorder 1, %s26
      %p232 = scmp.lt.s32.totalorder %s26, 3
      %p233 = pnand %p231, %p232
      %p234 = pneg %p233
      // Predicated region
      $region33: #{tpu_custom_call.1} parent=5 // pred_check
        _
      $region34: #{tpu_custom_call.1} parent=5 // pred_check_branch
        %236 = sbr.rel (%p233) target = $region36
      $region35: #{tpu_custom_call.1} parent=5 // pred_region
        %s237 = ssub.s32 %s26, 1
        %s238 = sand.u32 %s53, 1
        %s239 = scalar_lea.sflag [#allocation6], %s238
        %s240 = sand.u32 %s53, 1
        %s241 = smul.addr %s240, 112
        %s242 = scalar_lea.vmem [#allocation5], %s241
        // Predicated region
        $region37: #{tpu_custom_call.1} parent=35 // pred_check
          %p243 = pneg %p66
        $region38: #{tpu_custom_call.1} parent=35 // pred_check_branch
          %245 = sbr.rel (%p243) target = $region40
        $region39: #{tpu_custom_call.1} parent=35 // pred_region
          %247 = dma.done %s239, 1792
        $region40: #{tpu_custom_call.1} parent=35 // pred_fallthru
          _
        // Predicated region
        $region41: #{tpu_custom_call.1} parent=35 // pred_check
          %p248 = pneg %p87
        $region42: #{tpu_custom_call.1} parent=35 // pred_check_branch
          %250 = sbr.rel (%p248) target = $region44
        $region43: #{tpu_custom_call.1} parent=35 // pred_region
          %252 = dma.done [#allocation9], 2048
        $region44: #{tpu_custom_call.1} parent=35 // pred_fallthru
          _
        // Predicated region
        $region45: #{tpu_custom_call.1} parent=35 // pred_check
          %p253 = pneg %p108
        $region46: #{tpu_custom_call.1} parent=35 // pred_check_branch
          %255 = sbr.rel (%p253) target = $region48
        $region47: #{tpu_custom_call.1} parent=35 // pred_region
          %257 = dma.done [#allocation9], 4096
        $region48: #{tpu_custom_call.1} parent=35 // pred_fallthru
          _
        %s258 = sand.u32 %s53, 1
        %s259 = scalar_lea.sflag [#allocation6], %s258
        %s260 = sand.u32 %s53, 1
        %s261 = smul.addr %s260, 112
        %s262 = scalar_lea.vmem [#allocation5], %s261
        %p263 = pneg %p66
        %p264 = pneg %p63
        %p265 = pneg %p87
        %p266 = pneg %p84
        %p267 = pneg %p108
        %p268 = pneg %p105
        %p269 = pneg %p129
        %p270 = pneg %p126
        %p271 = pneg %p157
        %p272 = pneg %p154
        %s273 = sand.u32 %s144, 1
        %s274 = scalar_lea.sflag [#allocation7], %s273
        %s275 = sand.u32 %s144, 1
        %s276 = smul.addr %s275, 112
        %s277 = scalar_lea.vmem [#allocation11], %s276
        %s278 = smul.u32 28, %s36
        %s279 = smul.u32 28, %s36
        %p280 = scmp.eq.s32.totalorder %s36, 0
        // Predicated region
        $region49: #{tpu_custom_call.1} parent=35 // pred_check
          %p281 = pneg %p280
        $region50: #{tpu_custom_call.1} parent=35 // pred_check_branch
          %283 = sbr.rel (%p281) target = $region52
        $region51: #{tpu_custom_call.1} parent=35 // pred_region
          %v284 = vld [vmem:[#allocation8] sm:$0xff]
          %v285 = vld [vmem:[#allocation8 + $0x8] sm:$0xff]
          %v286 = vld [vmem:[#allocation8 + $0x10] sm:$0xff]
          %v287 = vld [vmem:[#allocation8 + $0x18] sm:$0xff]
          %v288 = vld [vmem:[#allocation8 + $0x20] sm:$0xff]
          %v289 = vld [vmem:[#allocation8 + $0x28] sm:$0xff]
          %v290 = vld [vmem:[#allocation8 + $0x30] sm:$0xff]
          %v291 = vld [vmem:[#allocation8 + $0x38] sm:$0xff]
          %v292 = vld [vmem:[#allocation8 + $0x40] sm:$0xff]
          %v293 = vld [vmem:[#allocation8 + $0x48] sm:$0xff]
          %v294 = vld [vmem:[#allocation8 + $0x50] sm:$0xff]
          %v295 = vld [vmem:[#allocation8 + $0x58] sm:$0xff]
          %v296 = vld [vmem:[#allocation8 + $0x60] sm:$0xff]
          %v297 = vld [vmem:[#allocation8 + $0x68] sm:$0xff]
          %v298 = vld [vmem:[#allocation8 + $0x70] sm:$0xff]
          %v299 = vld [vmem:[#allocation8 + $0x78] sm:$0xff]
          %s300 = smul.u32 %s35, 128
          %s301 = sld [smem:[#allocation4 + %s300]]
          %v302 = vld [vmem:[#allocation10] sm:$0xf]
          %v303 = vld [vmem:[#allocation10 + $0x4] sm:$0xf]
          %v304 = vld [vmem:[#allocation10 + $0x8] sm:$0xf]
          %v305 = vld [vmem:[#allocation10 + $0xc] sm:$0xf]
          %v306 = vld [vmem:[#allocation10 + $0x10] sm:$0xf]
          %v307 = vld [vmem:[#allocation10 + $0x14] sm:$0xf]
          %v308 = vld [vmem:[#allocation10 + $0x18] sm:$0xf]
          %v309 = vld [vmem:[#allocation10 + $0x1c] sm:$0xf]
          %v310 = vld [vmem:[#allocation10 + $0x20] sm:$0xf]
          %v311 = vld [vmem:[#allocation10 + $0x24] sm:$0xf]
          %v312 = vld [vmem:[#allocation10 + $0x28] sm:$0xf]
          %v313 = vld [vmem:[#allocation10 + $0x2c] sm:$0xf]
          %v314 = vld [vmem:[#allocation10 + $0x30] sm:$0xf]
          %v315 = vld [vmem:[#allocation10 + $0x34] sm:$0xf]
          %v316 = vld [vmem:[#allocation10 + $0x38] sm:$0xf]
          %v317 = vld [vmem:[#allocation10 + $0x3c] sm:$0xf]
          %v318 = vunpack.c.l.bf16 %v302
          %v319 = vunpack.c.l.bf16 %v303
          %v320 = vunpack.c.l.bf16 %v304
          %v321 = vunpack.c.l.bf16 %v305
          %v322 = vunpack.c.l.bf16 %v306
          %v323 = vunpack.c.l.bf16 %v307
          %v324 = vunpack.c.l.bf16 %v308
          %v325 = vunpack.c.l.bf16 %v309
          %v326 = vunpack.c.l.bf16 %v310
          %v327 = vunpack.c.l.bf16 %v311
          %v328 = vunpack.c.l.bf16 %v312
          %v329 = vunpack.c.l.bf16 %v313
          %v330 = vunpack.c.l.bf16 %v314
          %v331 = vunpack.c.l.bf16 %v315
          %v332 = vunpack.c.l.bf16 %v316
          %v333 = vunpack.c.l.bf16 %v317
          %v334 = vstv %s301
          %v335 = vmul.f32 %v334, %v318
          %v336 = vmul.f32 %v334, %v319
          %v337 = vmul.f32 %v334, %v320
          %v338 = vmul.f32 %v334, %v321
          %v339 = vmul.f32 %v334, %v322
          %v340 = vmul.f32 %v334, %v323
          %v341 = vmul.f32 %v334, %v324
          %v342 = vmul.f32 %v334, %v325
          %v343 = vmul.f32 %v334, %v326
          %v344 = vmul.f32 %v334, %v327
          %v345 = vmul.f32 %v334, %v328
          %v346 = vmul.f32 %v334, %v329
          %v347 = vmul.f32 %v334, %v330
          %v348 = vmul.f32 %v334, %v331
          %v349 = vmul.f32 %v334, %v332
          %v350 = vmul.f32 %v334, %v333
          %v351 = vadd.f32 %v284, %v335
          %v352 = vadd.f32 %v285, %v336
          %v353 = vadd.f32 %v286, %v337
          %v354 = vadd.f32 %v287, %v338
          %v355 = vadd.f32 %v288, %v339
          %v356 = vadd.f32 %v289, %v340
          %v357 = vadd.f32 %v290, %v341
          %v358 = vadd.f32 %v291, %v342
          %v359 = vadd.f32 %v292, %v343
          %v360 = vadd.f32 %v293, %v344
          %v361 = vadd.f32 %v294, %v345
          %v362 = vadd.f32 %v295, %v346
          %v363 = vadd.f32 %v296, %v347
          %v364 = vadd.f32 %v297, %v348
          %v365 = vadd.f32 %v298, %v349
          %v366 = vadd.f32 %v299, %v350
          %s367 = sadd.s32 %s300, 1
          %s368 = sld [smem:[#allocation4 + %s367]]
          %s369 = scalar_lea.vmem [#allocation10], 64
          %v370 = vld [vmem:[%s369] sm:$0xf]
          %v371 = vld [vmem:[%s369 + $0x4] sm:$0xf]
          %v372 = vld [vmem:[%s369 + $0x8] sm:$0xf]
          %v373 = vld [vmem:[%s369 + $0xc] sm:$0xf]
          %v374 = vld [vmem:[%s369 + $0x10] sm:$0xf]
          %v375 = vld [vmem:[%s369 + $0x14] sm:$0xf]
          %v376 = vld [vmem:[%s369 + $0x18] sm:$0xf]
          %v377 = vld [vmem:[%s369 + $0x1c] sm:$0xf]
          %v378 = vld [vmem:[%s369 + $0x20] sm:$0xf]
          %v379 = vld [vmem:[%s369 + $0x24] sm:$0xf]
          %v380 = vld [vmem:[%s369 + $0x28] sm:$0xf]
          %v381 = vld [vmem:[%s369 + $0x2c] sm:$0xf]
          %v382 = vld [vmem:[%s369 + $0x30] sm:$0xf]
          %v383 = vld [vmem:[%s369 + $0x34] sm:$0xf]
          %v384 = vld [vmem:[%s369 + $0x38] sm:$0xf]
          %v385 = vld [vmem:[%s369 + $0x3c] sm:$0xf]
          %v386 = vunpack.c.l.bf16 %v370
          %v387 = vunpack.c.l.bf16 %v371
          %v388 = vunpack.c.l.bf16 %v372
          %v389 = vunpack.c.l.bf16 %v373
          %v390 = vunpack.c.l.bf16 %v374
          %v391 = vunpack.c.l.bf16 %v375
          %v392 = vunpack.c.l.bf16 %v376
          %v393 = vunpack.c.l.bf16 %v377
          %v394 = vunpack.c.l.bf16 %v378
          %v395 = vunpack.c.l.bf16 %v379
          %v396 = vunpack.c.l.bf16 %v380
          %v397 = vunpack.c.l.bf16 %v381
          %v398 = vunpack.c.l.bf16 %v382
          %v399 = vunpack.c.l.bf16 %v383
          %v400 = vunpack.c.l.bf16 %v384
          %v401 = vunpack.c.l.bf16 %v385
          %v402 = vstv %s368
          %v403 = vmul.f32 %v402, %v386
          %v404 = vmul.f32 %v402, %v387
          %v405 = vmul.f32 %v402, %v388
          %v406 = vmul.f32 %v402, %v389
          %v407 = vmul.f32 %v402, %v390
          %v408 = vmul.f32 %v402, %v391
          %v409 = vmul.f32 %v402, %v392
          %v410 = vmul.f32 %v402, %v393
          %v411 = vmul.f32 %v402, %v394
          %v412 = vmul.f32 %v402, %v395
          %v413 = vmul.f32 %v402, %v396
          %v414 = vmul.f32 %v402, %v397
          %v415 = vmul.f32 %v402, %v398
          %v416 = vmul.f32 %v402, %v399
          %v417 = vmul.f32 %v402, %v400
          %v418 = vmul.f32 %v402, %v401
          %v419 = vadd.f32 %v351, %v403
          %v420 = vadd.f32 %v352, %v404
          %v421 = vadd.f32 %v353, %v405
          %v422 = vadd.f32 %v354, %v406
          %v423 = vadd.f32 %v355, %v407
          %v424 = vadd.f32 %v356, %v408
          %v425 = vadd.f32 %v357, %v409
          %v426 = vadd.f32 %v358, %v410
          %v427 = vadd.f32 %v359, %v411
          %v428 = vadd.f32 %v360, %v412
          %v429 = vadd.f32 %v361, %v413
          %v430 = vadd.f32 %v362, %v414
          %v431 = vadd.f32 %v363, %v415
          %v432 = vadd.f32 %v364, %v416
          %v433 = vadd.f32 %v365, %v417
          %v434 = vadd.f32 %v366, %v418
          %s435 = sadd.s32 %s300, 2
          %s436 = sld [smem:[#allocation4 + %s435]]
          %s437 = scalar_lea.vmem [#allocation10], 128
          %v438 = vld [vmem:[%s437] sm:$0xf]
          %v439 = vld [vmem:[%s437 + $0x4] sm:$0xf]
          %v440 = vld [vmem:[%s437 + $0x8] sm:$0xf]
          %v441 = vld [vmem:[%s437 + $0xc] sm:$0xf]
          %v442 = vld [vmem:[%s437 + $0x10] sm:$0xf]
          %v443 = vld [vmem:[%s437 + $0x14] sm:$0xf]
          %v444 = vld [vmem:[%s437 + $0x18] sm:$0xf]
          %v445 = vld [vmem:[%s437 + $0x1c] sm:$0xf]
          %v446 = vld [vmem:[%s437 + $0x20] sm:$0xf]
          %v447 = vld [vmem:[%s437 + $0x24] sm:$0xf]
          %v448 = vld [vmem:[%s437 + $0x28] sm:$0xf]
          %v449 = vld [vmem:[%s437 + $0x2c] sm:$0xf]
          %v450 = vld [vmem:[%s437 + $0x30] sm:$0xf]
          %v451 = vld [vmem:[%s437 + $0x34] sm:$0xf]
          %v452 = vld [vmem:[%s437 + $0x38] sm:$0xf]
          %v453 = vld [vmem:[%s437 + $0x3c] sm:$0xf]
          %v454 = vunpack.c.l.bf16 %v438
          %v455 = vunpack.c.l.bf16 %v439
          %v456 = vunpack.c.l.bf16 %v440
          %v457 = vunpack.c.l.bf16 %v441
          %v458 = vunpack.c.l.bf16 %v442
          %v459 = vunpack.c.l.bf16 %v443
          %v460 = vunpack.c.l.bf16 %v444
          %v461 = vunpack.c.l.bf16 %v445
          %v462 = vunpack.c.l.bf16 %v446
          %v463 = vunpack.c.l.bf16 %v447
          %v464 = vunpack.c.l.bf16 %v448
          %v465 = vunpack.c.l.bf16 %v449
          %v466 = vunpack.c.l.bf16 %v450
          %v467 = vunpack.c.l.bf16 %v451
          %v468 = vunpack.c.l.bf16 %v452
          %v469 = vunpack.c.l.bf16 %v453
          %v470 = vstv %s436
          %v471 = vmul.f32 %v470, %v454
          %v472 = vmul.f32 %v470, %v455
          %v473 = vmul.f32 %v470, %v456
          %v474 = vmul.f32 %v470, %v457
          %v475 = vmul.f32 %v470, %v458
          %v476 = vmul.f32 %v470, %v459
          %v477 = vmul.f32 %v470, %v460
          %v478 = vmul.f32 %v470, %v461
          %v479 = vmul.f32 %v470, %v462
          %v480 = vmul.f32 %v470, %v463
          %v481 = vmul.f32 %v470, %v464
          %v482 = vmul.f32 %v470, %v465
          %v483 = vmul.f32 %v470, %v466
          %v484 = vmul.f32 %v470, %v467
          %v485 = vmul.f32 %v470, %v468
          %v486 = vmul.f32 %v470, %v469
          %v487 = vadd.f32 %v419, %v471
          %v488 = vadd.f32 %v420, %v472
          %v489 = vadd.f32 %v421, %v473
          %v490 = vadd.f32 %v422, %v474
          %v491 = vadd.f32 %v423, %v475
          %v492 = vadd.f32 %v424, %v476
          %v493 = vadd.f32 %v425, %v477
          %v494 = vadd.f32 %v426, %v478
          %v495 = vadd.f32 %v427, %v479
          %v496 = vadd.f32 %v428, %v480
          %v497 = vadd.f32 %v429, %v481
          %v498 = vadd.f32 %v430, %v482
          %v499 = vadd.f32 %v431, %v483
          %v500 = vadd.f32 %v432, %v484
          %v501 = vadd.f32 %v433, %v485
          %v502 = vadd.f32 %v434, %v486
          %s503 = sadd.s32 %s300, 3
          %s504 = sld [smem:[#allocation4 + %s503]]
          %s505 = scalar_lea.vmem [#allocation10], 192
          %v506 = vld [vmem:[%s505] sm:$0xf]
          %v507 = vld [vmem:[%s505 + $0x4] sm:$0xf]
          %v508 = vld [vmem:[%s505 + $0x8] sm:$0xf]
          %v509 = vld [vmem:[%s505 + $0xc] sm:$0xf]
          %v510 = vld [vmem:[%s505 + $0x10] sm:$0xf]
          %v511 = vld [vmem:[%s505 + $0x14] sm:$0xf]
          %v512 = vld [vmem:[%s505 + $0x18] sm:$0xf]
          %v513 = vld [vmem:[%s505 + $0x1c] sm:$0xf]
          %v514 = vld [vmem:[%s505 + $0x20] sm:$0xf]
          %v515 = vld [vmem:[%s505 + $0x24] sm:$0xf]
          %v516 = vld [vmem:[%s505 + $0x28] sm:$0xf]
          %v517 = vld [vmem:[%s505 + $0x2c] sm:$0xf]
          %v518 = vld [vmem:[%s505 + $0x30] sm:$0xf]
          %v519 = vld [vmem:[%s505 + $0x34] sm:$0xf]
          %v520 = vld [vmem:[%s505 + $0x38] sm:$0xf]
          %v521 = vld [vmem:[%s505 + $0x3c] sm:$0xf]
          %v522 = vunpack.c.l.bf16 %v506
          %v523 = vunpack.c.l.bf16 %v507
          %v524 = vunpack.c.l.bf16 %v508
          %v525 = vunpack.c.l.bf16 %v509
          %v526 = vunpack.c.l.bf16 %v510
          %v527 = vunpack.c.l.bf16 %v511
          %v528 = vunpack.c.l.bf16 %v512
          %v529 = vunpack.c.l.bf16 %v513
          %v530 = vunpack.c.l.bf16 %v514
          %v531 = vunpack.c.l.bf16 %v515
          %v532 = vunpack.c.l.bf16 %v516
          %v533 = vunpack.c.l.bf16 %v517
          %v534 = vunpack.c.l.bf16 %v518
          %v535 = vunpack.c.l.bf16 %v519
          %v536 = vunpack.c.l.bf16 %v520
          %v537 = vunpack.c.l.bf16 %v521
          %v538 = vstv %s504
          %v539 = vmul.f32 %v538, %v522
          %v540 = vmul.f32 %v538, %v523
          %v541 = vmul.f32 %v538, %v524
          %v542 = vmul.f32 %v538, %v525
          %v543 = vmul.f32 %v538, %v526
          %v544 = vmul.f32 %v538, %v527
          %v545 = vmul.f32 %v538, %v528
          %v546 = vmul.f32 %v538, %v529
          %v547 = vmul.f32 %v538, %v530
          %v548 = vmul.f32 %v538, %v531
          %v549 = vmul.f32 %v538, %v532
          %v550 = vmul.f32 %v538, %v533
          %v551 = vmul.f32 %v538, %v534
          %v552 = vmul.f32 %v538, %v535
          %v553 = vmul.f32 %v538, %v536
          %v554 = vmul.f32 %v538, %v537
          %v555 = vadd.f32 %v487, %v539
          %v556 = vadd.f32 %v488, %v540
          %v557 = vadd.f32 %v489, %v541
          %v558 = vadd.f32 %v490, %v542
          %v559 = vadd.f32 %v491, %v543
          %v560 = vadd.f32 %v492, %v544
          %v561 = vadd.f32 %v493, %v545
          %v562 = vadd.f32 %v494, %v546
          %v563 = vadd.f32 %v495, %v547
          %v564 = vadd.f32 %v496, %v548
          %v565 = vadd.f32 %v497, %v549
          %v566 = vadd.f32 %v498, %v550
          %v567 = vadd.f32 %v499, %v551
          %v568 = vadd.f32 %v500, %v552
          %v569 = vadd.f32 %v501, %v553
          %v570 = vadd.f32 %v502, %v554
          %v571 = vpack.c.bf16 %v555, %v555
          %v572 = vpack.c.bf16 %v556, %v556
          %v573 = vpack.c.bf16 %v557, %v557
          %v574 = vpack.c.bf16 %v558, %v558
          %v575 = vpack.c.bf16 %v559, %v559
          %v576 = vpack.c.bf16 %v560, %v560
          %v577 = vpack.c.bf16 %v561, %v561
          %v578 = vpack.c.bf16 %v562, %v562
          %v579 = vpack.c.bf16 %v563, %v563
          %v580 = vpack.c.bf16 %v564, %v564
          %v581 = vpack.c.bf16 %v565, %v565
          %v582 = vpack.c.bf16 %v566, %v566
          %v583 = vpack.c.bf16 %v567, %v567
          %v584 = vpack.c.bf16 %v568, %v568
          %v585 = vpack.c.bf16 %v569, %v569
          %v586 = vpack.c.bf16 %v570, %v570
          %587 = vst [vmem:[#allocation2] sm:$0xf] %v571
          %588 = vst [vmem:[#allocation2 + $0x4] sm:$0xf] %v572
          %589 = vst [vmem:[#allocation2 + $0x8] sm:$0xf] %v573
          %590 = vst [vmem:[#allocation2 + $0xc] sm:$0xf] %v574
          %591 = vst [vmem:[#allocation2 + $0x10] sm:$0xf] %v575
          %592 = vst [vmem:[#allocation2 + $0x14] sm:$0xf] %v576
          %593 = vst [vmem:[#allocation2 + $0x18] sm:$0xf] %v577
          %594 = vst [vmem:[#allocation2 + $0x1c] sm:$0xf] %v578
          %595 = vst [vmem:[#allocation2 + $0x20] sm:$0xf] %v579
          %596 = vst [vmem:[#allocation2 + $0x24] sm:$0xf] %v580
          %597 = vst [vmem:[#allocation2 + $0x28] sm:$0xf] %v581
          %598 = vst [vmem:[#allocation2 + $0x2c] sm:$0xf] %v582
          %599 = vst [vmem:[#allocation2 + $0x30] sm:$0xf] %v583
          %600 = vst [vmem:[#allocation2 + $0x34] sm:$0xf] %v584
          %601 = vst [vmem:[#allocation2 + $0x38] sm:$0xf] %v585
          %602 = vst [vmem:[#allocation2 + $0x3c] sm:$0xf] %v586
        $region52: #{tpu_custom_call.1} parent=35 // pred_fallthru
          _
        %v603 = vld [vmem:[%s242] sm:$0xf]
        %v604 = vld [vmem:[%s242 + $0x4] sm:$0xf]
        %v605 = vld [vmem:[%s242 + $0x8] sm:$0xf]
        %v606 = vld [vmem:[%s242 + $0xc] sm:$0xf]
        %v607 = vld [vmem:[%s242 + $0x10] sm:$0xf]
        %v608 = vld [vmem:[%s242 + $0x14] sm:$0xf]
        %v609 = vld [vmem:[%s242 + $0x18] sm:$0xf]
        %v610 = vld [vmem:[%s242 + $0x1c] sm:$0xf]
        %v611 = vld [vmem:[%s242 + $0x20] sm:$0xf]
        %v612 = vld [vmem:[%s242 + $0x24] sm:$0xf]
        %v613 = vld [vmem:[%s242 + $0x28] sm:$0xf]
        %v614 = vld [vmem:[%s242 + $0x2c] sm:$0xf]
        %v615 = vld [vmem:[%s242 + $0x30] sm:$0xf]
        %v616 = vld [vmem:[%s242 + $0x34] sm:$0xf]
        %v617 = vld [vmem:[%s242 + $0x38] sm:$0xf]
        %v618 = vld [vmem:[%s242 + $0x3c] sm:$0xf]
        %v619 = vld [vmem:[%s242 + $0x40] sm:$0xf]
        %v620 = vld [vmem:[%s242 + $0x44] sm:$0xf]
        %v621 = vld [vmem:[%s242 + $0x48] sm:$0xf]
        %v622 = vld [vmem:[%s242 + $0x4c] sm:$0xf]
        %v623 = vld [vmem:[%s242 + $0x50] sm:$0xf]
        %v624 = vld [vmem:[%s242 + $0x54] sm:$0xf]
        %v625 = vld [vmem:[%s242 + $0x58] sm:$0xf]
        %v626 = vld [vmem:[%s242 + $0x5c] sm:$0xf]
        %v627 = vld [vmem:[%s242 + $0x60] sm:$0xf]
        %v628 = vld [vmem:[%s242 + $0x64] sm:$0xf]
        %v629 = vld [vmem:[%s242 + $0x68] sm:$0xf]
        %v630 = vld [vmem:[%s242 + $0x6c] sm:$0xf]
        %v631 = vld [vmem:[#allocation2] sm:$0xf]
        %v632 = vld [vmem:[#allocation2 + $0x4] sm:$0xf]
        %v633 = vld [vmem:[#allocation2 + $0x8] sm:$0xf]
        %v634 = vld [vmem:[#allocation2 + $0xc] sm:$0xf]
        %v635 = vld [vmem:[#allocation2 + $0x10] sm:$0xf]
        %v636 = vld [vmem:[#allocation2 + $0x14] sm:$0xf]
        %v637 = vld [vmem:[#allocation2 + $0x18] sm:$0xf]
        %v638 = vld [vmem:[#allocation2 + $0x1c] sm:$0xf]
        %v639 = vld [vmem:[#allocation2 + $0x20] sm:$0xf]
        %v640 = vld [vmem:[#allocation2 + $0x24] sm:$0xf]
        %v641 = vld [vmem:[#allocation2 + $0x28] sm:$0xf]
        %v642 = vld [vmem:[#allocation2 + $0x2c] sm:$0xf]
        %v643 = vld [vmem:[#allocation2 + $0x30] sm:$0xf]
        %v644 = vld [vmem:[#allocation2 + $0x34] sm:$0xf]
        %v645 = vld [vmem:[#allocation2 + $0x38] sm:$0xf]
        %v646 = vld [vmem:[#allocation2 + $0x3c] sm:$0xf]
        %v647 = vld [vmem:[%s4] sm:$0x1]
        %v649 = vperm.slane %v647, 0
        %v679 = vunpack.c.l.b16 %v603
        %v680 = vunpack.c.l.b16 %v604
        %v681 = vunpack.c.l.b16 %v605
        %v682 = vunpack.c.l.b16 %v606
        %v683 = vunpack.c.l.b16 %v607
        %v684 = vunpack.c.l.b16 %v608
        %v685 = vunpack.c.l.b16 %v609
        %v686 = vunpack.c.l.b16 %v610
        %v687 = vunpack.c.l.b16 %v611
        %v688 = vunpack.c.l.b16 %v612
        %v689 = vunpack.c.l.b16 %v613
        %v690 = vunpack.c.l.b16 %v614
        %v691 = vunpack.c.l.b16 %v615
        %v692 = vunpack.c.l.b16 %v616
        %v693 = vunpack.c.l.b16 %v617
        %v694 = vunpack.c.l.b16 %v618
        %v695 = vunpack.c.l.b16 %v619
        %v696 = vunpack.c.l.b16 %v620
        %v697 = vunpack.c.l.b16 %v621
        %v698 = vunpack.c.l.b16 %v622
        %v699 = vunpack.c.l.b16 %v623
        %v700 = vunpack.c.l.b16 %v624
        %v701 = vunpack.c.l.b16 %v625
        %v702 = vunpack.c.l.b16 %v626
        %v703 = vunpack.c.l.b16 %v627
        %v704 = vunpack.c.l.b16 %v628
        %v705 = vunpack.c.l.b16 %v629
        %v706 = vunpack.c.l.b16 %v630
        %v707 = vpack.c.b16 %v680, %v679
        %v708 = vpack.c.b16 %v682, %v681
        %v709 = vpack.c.b16 %v684, %v683
        %v710 = vpack.c.b16 %v686, %v685
        %v711 = vpack.c.b16 %v688, %v687
        %v712 = vpack.c.b16 %v690, %v689
        %v713 = vpack.c.b16 %v692, %v691
        %v714 = vpack.c.b16 %v694, %v693
        %v715 = vpack.c.b16 %v696, %v695
        %v716 = vpack.c.b16 %v698, %v697
        %v717 = vpack.c.b16 %v700, %v699
        %v718 = vpack.c.b16 %v702, %v701
        %v719 = vpack.c.b16 %v704, %v703
        %v720 = vpack.c.b16 %v706, %v705
        %v751 = vunpack.c.l.b16 %v631
        %v752 = vunpack.c.l.b16 %v632
        %v753 = vunpack.c.l.b16 %v633
        %v754 = vunpack.c.l.b16 %v634
        %v755 = vunpack.c.l.b16 %v635
        %v756 = vunpack.c.l.b16 %v636
        %v757 = vunpack.c.l.b16 %v637
        %v758 = vunpack.c.l.b16 %v638
        %v759 = vunpack.c.l.b16 %v639
        %v760 = vunpack.c.l.b16 %v640
        %v761 = vunpack.c.l.b16 %v641
        %v762 = vunpack.c.l.b16 %v642
        %v763 = vunpack.c.l.b16 %v643
        %v764 = vunpack.c.l.b16 %v644
        %v765 = vunpack.c.l.b16 %v645
        %v766 = vunpack.c.l.b16 %v646
        %v767 = vpack.c.b16 %v752, %v751
        %v768 = vpack.c.b16 %v754, %v753
        %v769 = vpack.c.b16 %v756, %v755
        %v770 = vpack.c.b16 %v758, %v757
        %v771 = vpack.c.b16 %v760, %v759
        %v772 = vpack.c.b16 %v762, %v761
        %v773 = vpack.c.b16 %v764, %v763
        %v774 = vpack.c.b16 %v766, %v765
        %783 = vmatpush.bf16.xpose.msra.mxu0 %v774
        %784 = vmatpush.bf16.xpose.msra.mxu0 %v773
        %785 = vmatpush.bf16.xpose.msra.mxu0 %v772
        %786 = vmatpush.bf16.xpose.msra.mxu0 %v771
        %787 = vmatpush.bf16.xpose.msra.mxu0 %v770
        %788 = vmatpush.bf16.xpose.msra.mxu0 %v769
        %789 = vmatpush.bf16.xpose.msra.mxu0 %v768
        %790 = vmatpush.bf16.xpose.msra.mxu0 %v767
        %791 = vmatmul.bf16.gmra.mxu0 %v707
        %v792 = vpop.f32.mrf.mxu0
        %v793 = vadd.f32 %v649, %v792
        %v794 = vpop.f32.mrf.mxu0
        %v795 = vadd.f32 %v649, %v794
        %796 = vmatmul.bf16.gmra.mxu0 %v708
        %v797 = vpop.f32.mrf.mxu0
        %v798 = vadd.f32 %v649, %v797
        %v799 = vpop.f32.mrf.mxu0
        %v800 = vadd.f32 %v649, %v799
        %801 = vmatmul.bf16.gmra.mxu0 %v709
        %v802 = vpop.f32.mrf.mxu0
        %v803 = vadd.f32 %v649, %v802
        %v804 = vpop.f32.mrf.mxu0
        %v805 = vadd.f32 %v649, %v804
        %806 = vmatmul.bf16.gmra.mxu0 %v710
        %v807 = vpop.f32.mrf.mxu0
        %v808 = vadd.f32 %v649, %v807
        %v809 = vpop.f32.mrf.mxu0
        %v810 = vadd.f32 %v649, %v809
        %811 = vmatmul.bf16.gmra.mxu0 %v711
        %v812 = vpop.f32.mrf.mxu0
        %v813 = vadd.f32 %v649, %v812
        %v814 = vpop.f32.mrf.mxu0
        %v815 = vadd.f32 %v649, %v814
        %816 = vmatmul.bf16.gmra.mxu0 %v712
        %v817 = vpop.f32.mrf.mxu0
        %v818 = vadd.f32 %v649, %v817
        %v819 = vpop.f32.mrf.mxu0
        %v820 = vadd.f32 %v649, %v819
        %821 = vmatmul.bf16.gmra.mxu0 %v713
        %v822 = vpop.f32.mrf.mxu0
        %v823 = vadd.f32 %v649, %v822
        %v824 = vpop.f32.mrf.mxu0
        %v825 = vadd.f32 %v649, %v824
        %826 = vmatmul.bf16.gmra.mxu0 %v714
        %v827 = vpop.f32.mrf.mxu0
        %v828 = vadd.f32 %v649, %v827
        %v829 = vpop.f32.mrf.mxu0
        %v830 = vadd.f32 %v649, %v829
        %831 = vmatmul.bf16.gmra.mxu0 %v715
        %v832 = vpop.f32.mrf.mxu0
        %v833 = vadd.f32 %v649, %v832
        %v834 = vpop.f32.mrf.mxu0
        %v835 = vadd.f32 %v649, %v834
        %836 = vmatmul.bf16.gmra.mxu0 %v716
        %v837 = vpop.f32.mrf.mxu0
        %v838 = vadd.f32 %v649, %v837
        %v839 = vpop.f32.mrf.mxu0
        %v840 = vadd.f32 %v649, %v839
        %841 = vmatmul.bf16.gmra.mxu0 %v717
        %v842 = vpop.f32.mrf.mxu0
        %v843 = vadd.f32 %v649, %v842
        %v844 = vpop.f32.mrf.mxu0
        %v845 = vadd.f32 %v649, %v844
        %846 = vmatmul.bf16.gmra.mxu0 %v718
        %v847 = vpop.f32.mrf.mxu0
        %v848 = vadd.f32 %v649, %v847
        %v849 = vpop.f32.mrf.mxu0
        %v850 = vadd.f32 %v649, %v849
        %851 = vmatmul.bf16.gmra.mxu0 %v719
        %v852 = vpop.f32.mrf.mxu0
        %v853 = vadd.f32 %v649, %v852
        %v854 = vpop.f32.mrf.mxu0
        %v855 = vadd.f32 %v649, %v854
        %856 = vmatmul.bf16.gmra.mxu0 %v720
        %v857 = vpop.f32.mrf.mxu0
        %v858 = vadd.f32 %v649, %v857
        %v859 = vpop.f32.mrf.mxu0
        %v860 = vadd.f32 %v649, %v859
        %861 = vdwg.mxu0
        %v862 = vpack.c.bf16 %v793, %v793
        %v863 = vpack.c.bf16 %v795, %v795
        %v864 = vpack.c.bf16 %v798, %v798
        %v865 = vpack.c.bf16 %v800, %v800
        %v866 = vpack.c.bf16 %v803, %v803
        %v867 = vpack.c.bf16 %v805, %v805
        %v868 = vpack.c.bf16 %v808, %v808
        %v869 = vpack.c.bf16 %v810, %v810
        %v870 = vpack.c.bf16 %v813, %v813
        %v871 = vpack.c.bf16 %v815, %v815
        %v872 = vpack.c.bf16 %v818, %v818
        %v873 = vpack.c.bf16 %v820, %v820
        %v874 = vpack.c.bf16 %v823, %v823
        %v875 = vpack.c.bf16 %v825, %v825
        %v876 = vpack.c.bf16 %v828, %v828
        %v877 = vpack.c.bf16 %v830, %v830
        %v878 = vpack.c.bf16 %v833, %v833
        %v879 = vpack.c.bf16 %v835, %v835
        %v880 = vpack.c.bf16 %v838, %v838
        %v881 = vpack.c.bf16 %v840, %v840
        %v882 = vpack.c.bf16 %v843, %v843
        %v883 = vpack.c.bf16 %v845, %v845
        %v884 = vpack.c.bf16 %v848, %v848
        %v885 = vpack.c.bf16 %v850, %v850
        %v886 = vpack.c.bf16 %v853, %v853
        %v887 = vpack.c.bf16 %v855, %v855
        %v888 = vpack.c.bf16 %v858, %v858
        %v889 = vpack.c.bf16 %v860, %v860
        %890 = vst [vmem:[%s277] sm:$0xf] %v862
        %891 = vst [vmem:[%s277 + $0x4] sm:$0xf] %v863
        %892 = vst [vmem:[%s277 + $0x8] sm:$0xf] %v864
        %893 = vst [vmem:[%s277 + $0xc] sm:$0xf] %v865
        %894 = vst [vmem:[%s277 + $0x10] sm:$0xf] %v866
        %895 = vst [vmem:[%s277 + $0x14] sm:$0xf] %v867
        %896 = vst [vmem:[%s277 + $0x18] sm:$0xf] %v868
        %897 = vst [vmem:[%s277 + $0x1c] sm:$0xf] %v869
        %898 = vst [vmem:[%s277 + $0x20] sm:$0xf] %v870
        %899 = vst [vmem:[%s277 + $0x24] sm:$0xf] %v871
        %900 = vst [vmem:[%s277 + $0x28] sm:$0xf] %v872
        %901 = vst [vmem:[%s277 + $0x2c] sm:$0xf] %v873
        %902 = vst [vmem:[%s277 + $0x30] sm:$0xf] %v874
        %903 = vst [vmem:[%s277 + $0x34] sm:$0xf] %v875
        %904 = vst [vmem:[%s277 + $0x38] sm:$0xf] %v876
        %905 = vst [vmem:[%s277 + $0x3c] sm:$0xf] %v877
        %906 = vst [vmem:[%s277 + $0x40] sm:$0xf] %v878
        %907 = vst [vmem:[%s277 + $0x44] sm:$0xf] %v879
        %908 = vst [vmem:[%s277 + $0x48] sm:$0xf] %v880
        %909 = vst [vmem:[%s277 + $0x4c] sm:$0xf] %v881
        %910 = vst [vmem:[%s277 + $0x50] sm:$0xf] %v882
        %911 = vst [vmem:[%s277 + $0x54] sm:$0xf] %v883
        %912 = vst [vmem:[%s277 + $0x58] sm:$0xf] %v884
        %913 = vst [vmem:[%s277 + $0x5c] sm:$0xf] %v885
        %914 = vst [vmem:[%s277 + $0x60] sm:$0xf] %v886
        %915 = vst [vmem:[%s277 + $0x64] sm:$0xf] %v887
        %916 = vst [vmem:[%s277 + $0x68] sm:$0xf] %v888
        %917 = vst [vmem:[%s277 + $0x6c] sm:$0xf] %v889
        %s918 = sand.u32 %s144, 1
        %s919 = scalar_lea.sflag [#allocation7], %s918
        %s920 = sand.u32 %s144, 1
        %s921 = smul.addr %s920, 112
        %s922 = scalar_lea.vmem [#allocation11], %s921
        // Predicated region
        $region53: #{tpu_custom_call.1} parent=35 // pred_check
          %p923 = pneg %p154
        $region54: #{tpu_custom_call.1} parent=35 // pred_check_branch
          %925 = sbr.rel (%p923) target = $region56
        $region55: #{tpu_custom_call.1} parent=35 // pred_region
          %s926 = smul.u32 28, %s36
          %928 = vsyncadd %s919, 0
          %s929 = smul.addr %s35, 28
          %s930 = sadd.s32 %s926, %s929
          %s931 = smul.addr %s930, 4
          %s932 = scalar_lea.hbm %s5, %s931
          %s933 = sshll.u32 %s922, 4
          %s934 = int_to_ptr.vmem [resolvable:$true] %s933
          %s935 = sshll.u32 %s932, 4
          %s936 = int_to_ptr.hbm [resolvable:$true] %s935
          %941 = dma.vmem_to_hbm [thread:$0]  %s934, 1792, %s936, %s919, 64, 64, 4
        $region56: #{tpu_custom_call.1} parent=35 // pred_fallthru
          _
      $region36: #{tpu_custom_call.1} parent=5 // pred_fallthru
        _
      %p942 = scmp.le.s32.totalorder 2, %s26
      // Predicated region
      $region57: #{tpu_custom_call.1} parent=5 // pred_check
        %p943 = pneg %p942
      $region58: #{tpu_custom_call.1} parent=5 // pred_check_branch
        %945 = sbr.rel (%p943) target = $region60
      $region59: #{tpu_custom_call.1} parent=5 // pred_region
        %s946 = ssub.s32 %s26, 2
        // Predicated region
        $region61: #{tpu_custom_call.1} parent=59 // pred_check
          %p947 = pneg %p160
        $region62: #{tpu_custom_call.1} parent=59 // pred_check_branch
          %949 = sbr.rel (%p947) target = $region64
        $region63: #{tpu_custom_call.1} parent=59 // pred_region
          %s950 = sand.u32 %s145, 1
          %s951 = scalar_lea.sflag [#allocation7], %s950
          %s952 = sand.u32 %s145, 1
          %s953 = smul.addr %s952, 112
          %s954 = scalar_lea.vmem [#allocation11], %s953
          %956 = dma.done %s951, 1792
        $region64: #{tpu_custom_call.1} parent=59 // pred_fallthru
          _
      $region60: #{tpu_custom_call.1} parent=5 // pred_fallthru
        _
    $region6: #{tpu_custom_call.1} parent=1 // loop_footer
      %s30 = sadd.s32 1, %s26
    $region7: #{tpu_custom_call.1} parent=1 // loop_footer_branch
      %25 = sbr.rel target = $region3
    $region8: #{tpu_custom_call.1} parent=1 // loop_exit
      _
    %957 = vsyncpa [#allocation6], 1
    %s958 = scalar_lea.sflag [#allocation6], 1
    %959 = vsyncpa %s958, 1
    %960 = vsyncpa [#allocation9], 1
    %961 = vsyncpa [#allocation7], 1
    %s962 = scalar_lea.sflag [#allocation7], 1
    %963 = vsyncpa %s962, 1

</llo_original>
